<compile_context>
chip_gen: v7x
topology: tpu7x:2x2x1
jax: 0.10.0
libtpu: 0.0.40
codegen_flags: <defaults>
</compile_context>

<pallas_src>
import functools

import numpy as np
import jax
import jax.numpy as jnp
from jax.experimental import pallas as pl
from jax.experimental.pallas import tpu as pltpu


def _shift_lanes(a, s, flat_len):
    """out[:, i] = a[:, (i + s) % flat_len]  (two lane slices + concat).

    Equivalent to jnp.roll(a, -s, axis=-1).  Wrap-around values only land on
    canvas-border positions which are masked out / never copied to the output.
    """
    k = s % flat_len
    if k == 0:
        return a
    return jnp.concatenate([a[:, k:], a[:, :k]], axis=1)


def fused_kernel(x_ref, w_ref, b_ref, m_ref, g_ref, bt_ref, o_ref, *,
                 n_batch, flat_len, inv_count, x_shifts, p_shifts):
    """conv1(x) + conv2/3/4(avgpool(x)) + bias, then batch-stat BN + ReLU.

    Layout: channels on sublanes, flattened padded spatial canvas on lanes.
    """
    F = flat_len
    w = w_ref[...]               # (Cout, 17 * Cin_pad)   concatenated tap weights
    bias = b_ref[...]            # (Cout, 1)              b1 + b2 + b3 + b4
    mask = m_ref[...]            # (1, F)                 1.0 on valid canvas positions

    zs = []
    for n in range(n_batch):
        xf = x_ref[n]            # (Cin_pad, F)
        # The same 9 lane-shifted taps serve conv1 and the 3x3 average pool.
        x_taps = [_shift_lanes(xf, s, F) for s in x_shifts]
        pool = x_taps[0]
        for t in x_taps[1:]:
            pool = pool + t
        # count_include_pad=True -> always /9; mask == ZeroPad2d border of p.
        pool = pool * (1.0 / 9.0) * mask
        # 8 dilated (+/-3) taps of the pooled map for conv2 / conv3 / conv4.
        p_taps = [_shift_lanes(pool, s, F) for s in p_shifts]
        # Single fused im2col matmul on the MXU (K slots are tile-aligned).
        xcat = jnp.concatenate(x_taps + p_taps, axis=0)        # (17*Cin_pad, F)
        z = jnp.dot(w, xcat, preferred_element_type=jnp.float32) + bias
        zs.append(z)                                           # (Cout, F)

    # Training-mode BatchNorm2d statistics over the N*H*W valid positions.
    s1 = zs[0] * mask
    for z in zs[1:]:
        s1 = s1 + z * mask
    mean = jnp.sum(s1, axis=1, keepdims=True) * inv_count      # (Cout, 1)
    ssq = None
    for z in zs:
        d = (z - mean) * mask
        part = jnp.sum(d * d, axis=1, keepdims=True)
        ssq = part if ssq is None else ssq + part
    var = ssq * inv_count                                      # biased variance
    scale = g_ref[...] * jax.lax.rsqrt(var + 1e-5)             # (Cout, 1)
    shift = bt_ref[...] - mean * scale                         # (Cout, 1)

    for n in range(n_batch):
        o_ref[n] = jnp.maximum(zs[n] * scale + shift, 0.0)     # lane-dense store


def large_field_9_forward(x_nchw, params):
    N, Cin, H, W = x_nchw.shape
    Cout = params["w1"].shape[0]

    PAD = 3                                  # covers conv1 pad-1 and the +/-3 dilated taps
    Hc, Wc = H + 2 * PAD, W + 2 * PAD
    M = Hc * Wc
    F = ((M + 127) // 128) * 128             # lane-dense flat length (multiple of 128)
    Cin_pad = ((Cin + 7) // 8) * 8           # 8-row K slot per tap -> aligned concat

    # Channel-on-sublane / spatial-on-lane layout: (N, Cin_pad, F).
    x = x_nchw.astype(jnp.float32)
    xc = jnp.pad(x, ((0, 0), (0, Cin_pad - Cin), (PAD, PAD), (PAD, PAD)))
    x_flat = jnp.pad(xc.reshape(N, Cin_pad, M), ((0, 0), (0, 0), (0, F - M)))

    # Tap offsets (dh, dw) on the canvas and their flat lane shifts.
    x_offsets = [(dh, dw) for dh in (-1, 0, 1) for dw in (-1, 0, 1)]        # conv1 / pool
    p_offsets = [(0, -3), (0, 3),                                           # conv2 (1,2) dil 6
                 (-3, 0), (3, 0),                                           # conv3 (2,1) dil 6
                 (-3, -3), (-3, 3), (3, -3), (3, 3)]                        # conv4 (2,2) dil 6
    x_shifts = tuple(dh * Wc + dw for dh, dw in x_offsets)
    p_shifts = tuple(dh * Wc + dw for dh, dw in p_offsets)

    # Concatenated tap weights in the exact same tap order, each tap padded to
    # a Cin_pad-wide K slot (zeros in the padded channels).
    w1, w2, w3, w4 = params["w1"], params["w2"], params["w3"], params["w4"]
    tap_ws = [w1[:, :, kh, kw] for kh in range(3) for kw in range(3)]
    tap_ws += [w2[:, :, 0, 0], w2[:, :, 0, 1]]
    tap_ws += [w3[:, :, 0, 0], w3[:, :, 1, 0]]
    tap_ws += [w4[:, :, 0, 0], w4[:, :, 0, 1], w4[:, :, 1, 0], w4[:, :, 1, 1]]
    tap_ws = [jnp.pad(t, ((0, 0), (0, Cin_pad - Cin))) for t in tap_ws]
    w_cat = jnp.concatenate(tap_ws, axis=1).astype(jnp.float32)   # (Cout, 17*Cin_pad)

    bias = (params["b1"] + params["b2"] + params["b3"] + params["b4"]
            ).reshape(Cout, 1).astype(jnp.float32)
    gamma = params["gamma"].reshape(Cout, 1).astype(jnp.float32)
    beta = params["beta"].reshape(Cout, 1).astype(jnp.float32)

    # Valid-region mask over the flat canvas (static constant).
    idx = np.arange(F)
    rows, cols = idx // Wc, idx % Wc
    valid = (idx < M) & (rows >= PAD) & (rows < PAD + H) & \
            (cols >= PAD) & (cols < PAD + W)
    mask = jnp.asarray(valid.astype(np.float32)).reshape(1, F)

    kernel = functools.partial(
        fused_kernel, n_batch=N, flat_len=F,
        inv_count=1.0 / float(N * H * W),
        x_shifts=x_shifts, p_shifts=p_shifts)

    out_flat = pl.pallas_call(
        kernel,
        out_shape=jax.ShapeDtypeStruct((N, Cout, F), jnp.float32),
        in_specs=[pl.BlockSpec(memory_space=pltpu.MemorySpace.VMEM)] * 6,
        out_specs=pl.BlockSpec(memory_space=pltpu.MemorySpace.VMEM),
    )(x_flat, w_cat, bias, mask, gamma, beta)

    # Output is already NCHW; just peel the canvas border (cheap XLA slice).
    out = out_flat[:, :, :M].reshape(N, Cout, Hc, Wc)[:, :, PAD:PAD + H, PAD:PAD + W]
    return out


def reference_forward(x_nchw, params):
    """Pure-JAX NCHW reference mirroring the PyTorch forward (training-mode BN)."""
    dn = ("NCHW", "OIHW", "NCHW")
    conv = functools.partial(jax.lax.conv_general_dilated,
                             window_strides=(1, 1), dimension_numbers=dn,
                             precision=jax.lax.Precision.HIGHEST)
    x1 = conv(x_nchw, params["w1"], padding=((1, 1), (1, 1))) \
        + params["b1"][None, :, None, None]
    xpad = jnp.pad(x_nchw, ((0, 0), (0, 0), (1, 1), (1, 1)))
    p = jax.lax.reduce_window(xpad, 0.0, jax.lax.add,
                              (1, 1, 3, 3), (1, 1, 1, 1), "VALID") / 9.0
    pA = jnp.pad(p, ((0, 0), (0, 0), (0, 0), (3, 3)))
    x21 = conv(pA, params["w2"], padding=((0, 0), (0, 0)), rhs_dilation=(6, 6)) \
        + params["b2"][None, :, None, None]
    pB = jnp.pad(p, ((0, 0), (0, 0), (3, 3), (0, 0)))
    x22 = conv(pB, params["w3"], padding=((0, 0), (0, 0)), rhs_dilation=(6, 6)) \
        + params["b3"][None, :, None, None]
    pC = jnp.pad(p, ((0, 0), (0, 0), (3, 3), (3, 3)))
    x23 = conv(pC, params["w4"], padding=((0, 0), (0, 0)), rhs_dilation=(6, 6)) \
        + params["b4"][None, :, None, None]
    z = x1 + x21 + x22 + x23
    mean = jnp.mean(z, axis=(0, 2, 3), keepdims=True)
    var = jnp.mean((z - mean) ** 2, axis=(0, 2, 3), keepdims=True)
    y = (z - mean) * jax.lax.rsqrt(var + 1e-5) * params["gamma"][None, :, None, None] \
        + params["beta"][None, :, None, None]
    return jnp.maximum(y, 0.0)


if __name__ == "__main__":
    N, Cin, Cout, H, W = 2, 4, 8, 16, 16
    key = jax.random.PRNGKey(0)
    ks = jax.random.split(key, 9)
    params = {
        "w1": 0.1 * jax.random.normal(ks[0], (Cout, Cin, 3, 3), jnp.float32),
        "b1": 0.1 * jax.random.normal(ks[1], (Cout,), jnp.float32),
        "w2": 0.1 * jax.random.normal(ks[2], (Cout, Cin, 1, 2), jnp.float32),
        "b2": 0.1 * jax.random.normal(ks[3], (Cout,), jnp.float32),
        "w3": 0.1 * jax.random.normal(ks[4], (Cout, Cin, 2, 1), jnp.float32),
        "b3": 0.1 * jax.random.normal(ks[5], (Cout,), jnp.float32),
        "w4": 0.1 * jax.random.normal(ks[6], (Cout, Cin, 2, 2), jnp.float32),
        "b4": 0.1 * jax.random.normal(ks[7], (Cout,), jnp.float32),
        "gamma": jnp.ones((Cout,), jnp.float32),   # BatchNorm2d default weight
        "beta": jnp.zeros((Cout,), jnp.float32),   # BatchNorm2d default bias
    }
    x = jax.random.normal(ks[8], (N, Cin, H, W), jnp.float32)

    out = jax.jit(large_field_9_forward)(x, params)
    out = jax.block_until_ready(out)

    ref = reference_forward(x, params)
    if not np.allclose(np.asarray(out), np.asarray(ref), atol=1e-2, rtol=1e-2):
        diff = float(np.max(np.abs(np.asarray(out) - np.asarray(ref))))
        raise SystemExit(f"mismatch vs reference, max abs diff = {diff}")
    print("KERNEL_OK")
</pallas_src>

<mosaic_0001>
module attributes {stable_mosaic.version = 11 : i64} {
  func.func @fused_kernel(%arg0: memref<2x8x512xf32, #tpu.memory_space<vmem>>, %arg1: memref<8x136xf32, #tpu.memory_space<vmem>>, %arg2: memref<8x1xf32, #tpu.memory_space<vmem>>, %arg3: memref<1x512xf32, #tpu.memory_space<vmem>>, %arg4: memref<8x1xf32, #tpu.memory_space<vmem>>, %arg5: memref<8x1xf32, #tpu.memory_space<vmem>>, %arg6: memref<2x8x512xf32, #tpu.memory_space<vmem>>) attributes {dimension_semantics = [], scalar_prefetch = 0 : i64, scratch_operands = 0 : i64, tpu.core_type = #tpu.core_type<tc>} {
    %c0 = arith.constant 0 : index
    %c0_0 = arith.constant 0 : index
    %0 = vector.load %arg1[%c0, %c0_0] : memref<8x136xf32, #tpu.memory_space<vmem>>, vector<8x136xf32>
    %c0_1 = arith.constant 0 : index
    %c0_2 = arith.constant 0 : index
    %1 = vector.load %arg2[%c0_1, %c0_2] : memref<8x1xf32, #tpu.memory_space<vmem>>, vector<8x1xf32>
    %c0_3 = arith.constant 0 : index
    %c0_4 = arith.constant 0 : index
    %2 = vector.load %arg3[%c0_3, %c0_4] : memref<1x512xf32, #tpu.memory_space<vmem>>, vector<1x512xf32>
    %c0_5 = arith.constant 0 : index
    %c0_6 = arith.constant 0 : index
    %c0_7 = arith.constant 0 : index
    %3 = vector.load %arg0[%c0_5, %c0_6, %c0_7] : memref<2x8x512xf32, #tpu.memory_space<vmem>>, vector<1x8x512xf32>
    %4 = vector.shape_cast %3 : vector<1x8x512xf32> to vector<8x512xf32>
    %5 = vector.extract_strided_slice %4 {offsets = [0, 489], sizes = [8, 23], strides = [1, 1]} : vector<8x512xf32> to vector<8x23xf32>
    %6 = vector.extract_strided_slice %4 {offsets = [0, 0], sizes = [8, 489], strides = [1, 1]} : vector<8x512xf32> to vector<8x489xf32>
    %7 = tpu.concatenate %5, %6 in 1 : vector<8x23xf32>, vector<8x489xf32> -> vector<8x512xf32>
    %8 = vector.extract_strided_slice %4 {offsets = [0, 490], sizes = [8, 22], strides = [1, 1]} : vector<8x512xf32> to vector<8x22xf32>
    %9 = vector.extract_strided_slice %4 {offsets = [0, 0], sizes = [8, 490], strides = [1, 1]} : vector<8x512xf32> to vector<8x490xf32>
    %10 = tpu.concatenate %8, %9 in 1 : vector<8x22xf32>, vector<8x490xf32> -> vector<8x512xf32>
    %11 = vector.extract_strided_slice %4 {offsets = [0, 491], sizes = [8, 21], strides = [1, 1]} : vector<8x512xf32> to vector<8x21xf32>
    %12 = vector.extract_strided_slice %4 {offsets = [0, 0], sizes = [8, 491], strides = [1, 1]} : vector<8x512xf32> to vector<8x491xf32>
    %13 = tpu.concatenate %11, %12 in 1 : vector<8x21xf32>, vector<8x491xf32> -> vector<8x512xf32>
    %14 = vector.extract_strided_slice %4 {offsets = [0, 511], sizes = [8, 1], strides = [1, 1]} : vector<8x512xf32> to vector<8x1xf32>
    %15 = vector.extract_strided_slice %4 {offsets = [0, 0], sizes = [8, 511], strides = [1, 1]} : vector<8x512xf32> to vector<8x511xf32>
    %16 = tpu.concatenate %14, %15 in 1 : vector<8x1xf32>, vector<8x511xf32> -> vector<8x512xf32>
    %17 = vector.extract_strided_slice %4 {offsets = [0, 1], sizes = [8, 511], strides = [1, 1]} : vector<8x512xf32> to vector<8x511xf32>
    %18 = vector.extract_strided_slice %4 {offsets = [0, 0], sizes = [8, 1], strides = [1, 1]} : vector<8x512xf32> to vector<8x1xf32>
    %19 = tpu.concatenate %17, %18 in 1 : vector<8x511xf32>, vector<8x1xf32> -> vector<8x512xf32>
    %20 = vector.extract_strided_slice %4 {offsets = [0, 21], sizes = [8, 491], strides = [1, 1]} : vector<8x512xf32> to vector<8x491xf32>
    %21 = vector.extract_strided_slice %4 {offsets = [0, 0], sizes = [8, 21], strides = [1, 1]} : vector<8x512xf32> to vector<8x21xf32>
    %22 = tpu.concatenate %20, %21 in 1 : vector<8x491xf32>, vector<8x21xf32> -> vector<8x512xf32>
    %23 = vector.extract_strided_slice %4 {offsets = [0, 22], sizes = [8, 490], strides = [1, 1]} : vector<8x512xf32> to vector<8x490xf32>
    %24 = vector.extract_strided_slice %4 {offsets = [0, 0], sizes = [8, 22], strides = [1, 1]} : vector<8x512xf32> to vector<8x22xf32>
    %25 = tpu.concatenate %23, %24 in 1 : vector<8x490xf32>, vector<8x22xf32> -> vector<8x512xf32>
    %26 = vector.extract_strided_slice %4 {offsets = [0, 23], sizes = [8, 489], strides = [1, 1]} : vector<8x512xf32> to vector<8x489xf32>
    %27 = vector.extract_strided_slice %4 {offsets = [0, 0], sizes = [8, 23], strides = [1, 1]} : vector<8x512xf32> to vector<8x23xf32>
    %28 = tpu.concatenate %26, %27 in 1 : vector<8x489xf32>, vector<8x23xf32> -> vector<8x512xf32>
    %29 = arith.addf %7, %10 : vector<8x512xf32>
    %30 = arith.addf %29, %13 : vector<8x512xf32>
    %31 = arith.addf %30, %16 : vector<8x512xf32>
    %32 = arith.addf %31, %4 : vector<8x512xf32>
    %33 = arith.addf %32, %19 : vector<8x512xf32>
    %34 = arith.addf %33, %22 : vector<8x512xf32>
    %35 = arith.addf %34, %25 : vector<8x512xf32>
    %36 = arith.addf %35, %28 : vector<8x512xf32>
    %cst = arith.constant 0.111111112 : f32
    %37 = vector.broadcast %cst : f32 to vector<8x512xf32>
    %38 = arith.mulf %36, %37 : vector<8x512xf32>
    %39 = vector.broadcast %2 : vector<1x512xf32> to vector<8x512xf32>
    %40 = arith.mulf %38, %39 : vector<8x512xf32>
    %41 = vector.extract_strided_slice %40 {offsets = [0, 509], sizes = [8, 3], strides = [1, 1]} : vector<8x512xf32> to vector<8x3xf32>
    %42 = vector.extract_strided_slice %40 {offsets = [0, 0], sizes = [8, 509], strides = [1, 1]} : vector<8x512xf32> to vector<8x509xf32>
    %43 = tpu.concatenate %41, %42 in 1 : vector<8x3xf32>, vector<8x509xf32> -> vector<8x512xf32>
    %44 = vector.extract_strided_slice %40 {offsets = [0, 3], sizes = [8, 509], strides = [1, 1]} : vector<8x512xf32> to vector<8x509xf32>
    %45 = vector.extract_strided_slice %40 {offsets = [0, 0], sizes = [8, 3], strides = [1, 1]} : vector<8x512xf32> to vector<8x3xf32>
    %46 = tpu.concatenate %44, %45 in 1 : vector<8x509xf32>, vector<8x3xf32> -> vector<8x512xf32>
    %47 = vector.extract_strided_slice %40 {offsets = [0, 446], sizes = [8, 66], strides = [1, 1]} : vector<8x512xf32> to vector<8x66xf32>
    %48 = vector.extract_strided_slice %40 {offsets = [0, 0], sizes = [8, 446], strides = [1, 1]} : vector<8x512xf32> to vector<8x446xf32>
    %49 = tpu.concatenate %47, %48 in 1 : vector<8x66xf32>, vector<8x446xf32> -> vector<8x512xf32>
    %50 = vector.extract_strided_slice %40 {offsets = [0, 66], sizes = [8, 446], strides = [1, 1]} : vector<8x512xf32> to vector<8x446xf32>
    %51 = vector.extract_strided_slice %40 {offsets = [0, 0], sizes = [8, 66], strides = [1, 1]} : vector<8x512xf32> to vector<8x66xf32>
    %52 = tpu.concatenate %50, %51 in 1 : vector<8x446xf32>, vector<8x66xf32> -> vector<8x512xf32>
    %53 = vector.extract_strided_slice %40 {offsets = [0, 443], sizes = [8, 69], strides = [1, 1]} : vector<8x512xf32> to vector<8x69xf32>
    %54 = vector.extract_strided_slice %40 {offsets = [0, 0], sizes = [8, 443], strides = [1, 1]} : vector<8x512xf32> to vector<8x443xf32>
    %55 = tpu.concatenate %53, %54 in 1 : vector<8x69xf32>, vector<8x443xf32> -> vector<8x512xf32>
    %56 = vector.extract_strided_slice %40 {offsets = [0, 449], sizes = [8, 63], strides = [1, 1]} : vector<8x512xf32> to vector<8x63xf32>
    %57 = vector.extract_strided_slice %40 {offsets = [0, 0], sizes = [8, 449], strides = [1, 1]} : vector<8x512xf32> to vector<8x449xf32>
    %58 = tpu.concatenate %56, %57 in 1 : vector<8x63xf32>, vector<8x449xf32> -> vector<8x512xf32>
    %59 = vector.extract_strided_slice %40 {offsets = [0, 63], sizes = [8, 449], strides = [1, 1]} : vector<8x512xf32> to vector<8x449xf32>
    %60 = vector.extract_strided_slice %40 {offsets = [0, 0], sizes = [8, 63], strides = [1, 1]} : vector<8x512xf32> to vector<8x63xf32>
    %61 = tpu.concatenate %59, %60 in 1 : vector<8x449xf32>, vector<8x63xf32> -> vector<8x512xf32>
    %62 = vector.extract_strided_slice %40 {offsets = [0, 69], sizes = [8, 443], strides = [1, 1]} : vector<8x512xf32> to vector<8x443xf32>
    %63 = vector.extract_strided_slice %40 {offsets = [0, 0], sizes = [8, 69], strides = [1, 1]} : vector<8x512xf32> to vector<8x69xf32>
    %64 = tpu.concatenate %62, %63 in 1 : vector<8x443xf32>, vector<8x69xf32> -> vector<8x512xf32>
    %65 = tpu.concatenate %7, %10, %13, %16, %4, %19, %22, %25, %28, %43, %46, %49, %52, %55, %58, %61 in 0 : vector<8x512xf32>, vector<8x512xf32>, vector<8x512xf32>, vector<8x512xf32>, vector<8x512xf32>, vector<8x512xf32>, vector<8x512xf32>, vector<8x512xf32>, vector<8x512xf32>, vector<8x512xf32>, vector<8x512xf32>, vector<8x512xf32>, vector<8x512xf32>, vector<8x512xf32>, vector<8x512xf32>, vector<8x512xf32> -> vector<128x512xf32>
    %66 = tpu.concatenate %65, %64 in 0 : vector<128x512xf32>, vector<8x512xf32> -> vector<136x512xf32>
    %cst_8 = arith.constant dense<0.000000e+00> : vector<8x512xf32>
    %67 = tpu.matmul %0, %66, %cst_8 {dimension_numbers = #tpu.dot_dimension_numbers<[1], [0], [0], [1], [0, 0, 1, 1], [], []>} : vector<8x136xf32>, vector<136x512xf32>, vector<8x512xf32> -> vector<8x512xf32>
    %68 = vector.broadcast %1 : vector<8x1xf32> to vector<8x512xf32>
    %69 = arith.addf %67, %68 : vector<8x512xf32>
    %c1 = arith.constant 1 : index
    %c0_9 = arith.constant 0 : index
    %c0_10 = arith.constant 0 : index
    %70 = vector.load %arg0[%c1, %c0_9, %c0_10] : memref<2x8x512xf32, #tpu.memory_space<vmem>>, vector<1x8x512xf32>
    %71 = vector.shape_cast %70 : vector<1x8x512xf32> to vector<8x512xf32>
    %72 = vector.extract_strided_slice %71 {offsets = [0, 489], sizes = [8, 23], strides = [1, 1]} : vector<8x512xf32> to vector<8x23xf32>
    %73 = vector.extract_strided_slice %71 {offsets = [0, 0], sizes = [8, 489], strides = [1, 1]} : vector<8x512xf32> to vector<8x489xf32>
    %74 = tpu.concatenate %72, %73 in 1 : vector<8x23xf32>, vector<8x489xf32> -> vector<8x512xf32>
    %75 = vector.extract_strided_slice %71 {offsets = [0, 490], sizes = [8, 22], strides = [1, 1]} : vector<8x512xf32> to vector<8x22xf32>
    %76 = vector.extract_strided_slice %71 {offsets = [0, 0], sizes = [8, 490], strides = [1, 1]} : vector<8x512xf32> to vector<8x490xf32>
    %77 = tpu.concatenate %75, %76 in 1 : vector<8x22xf32>, vector<8x490xf32> -> vector<8x512xf32>
    %78 = vector.extract_strided_slice %71 {offsets = [0, 491], sizes = [8, 21], strides = [1, 1]} : vector<8x512xf32> to vector<8x21xf32>
    %79 = vector.extract_strided_slice %71 {offsets = [0, 0], sizes = [8, 491], strides = [1, 1]} : vector<8x512xf32> to vector<8x491xf32>
    %80 = tpu.concatenate %78, %79 in 1 : vector<8x21xf32>, vector<8x491xf32> -> vector<8x512xf32>
    %81 = vector.extract_strided_slice %71 {offsets = [0, 511], sizes = [8, 1], strides = [1, 1]} : vector<8x512xf32> to vector<8x1xf32>
    %82 = vector.extract_strided_slice %71 {offsets = [0, 0], sizes = [8, 511], strides = [1, 1]} : vector<8x512xf32> to vector<8x511xf32>
    %83 = tpu.concatenate %81, %82 in 1 : vector<8x1xf32>, vector<8x511xf32> -> vector<8x512xf32>
    %84 = vector.extract_strided_slice %71 {offsets = [0, 1], sizes = [8, 511], strides = [1, 1]} : vector<8x512xf32> to vector<8x511xf32>
    %85 = vector.extract_strided_slice %71 {offsets = [0, 0], sizes = [8, 1], strides = [1, 1]} : vector<8x512xf32> to vector<8x1xf32>
    %86 = tpu.concatenate %84, %85 in 1 : vector<8x511xf32>, vector<8x1xf32> -> vector<8x512xf32>
    %87 = vector.extract_strided_slice %71 {offsets = [0, 21], sizes = [8, 491], strides = [1, 1]} : vector<8x512xf32> to vector<8x491xf32>
    %88 = vector.extract_strided_slice %71 {offsets = [0, 0], sizes = [8, 21], strides = [1, 1]} : vector<8x512xf32> to vector<8x21xf32>
    %89 = tpu.concatenate %87, %88 in 1 : vector<8x491xf32>, vector<8x21xf32> -> vector<8x512xf32>
    %90 = vector.extract_strided_slice %71 {offsets = [0, 22], sizes = [8, 490], strides = [1, 1]} : vector<8x512xf32> to vector<8x490xf32>
    %91 = vector.extract_strided_slice %71 {offsets = [0, 0], sizes = [8, 22], strides = [1, 1]} : vector<8x512xf32> to vector<8x22xf32>
    %92 = tpu.concatenate %90, %91 in 1 : vector<8x490xf32>, vector<8x22xf32> -> vector<8x512xf32>
    %93 = vector.extract_strided_slice %71 {offsets = [0, 23], sizes = [8, 489], strides = [1, 1]} : vector<8x512xf32> to vector<8x489xf32>
    %94 = vector.extract_strided_slice %71 {offsets = [0, 0], sizes = [8, 23], strides = [1, 1]} : vector<8x512xf32> to vector<8x23xf32>
    %95 = tpu.concatenate %93, %94 in 1 : vector<8x489xf32>, vector<8x23xf32> -> vector<8x512xf32>
    %96 = arith.addf %74, %77 : vector<8x512xf32>
    %97 = arith.addf %96, %80 : vector<8x512xf32>
    %98 = arith.addf %97, %83 : vector<8x512xf32>
    %99 = arith.addf %98, %71 : vector<8x512xf32>
    %100 = arith.addf %99, %86 : vector<8x512xf32>
    %101 = arith.addf %100, %89 : vector<8x512xf32>
    %102 = arith.addf %101, %92 : vector<8x512xf32>
    %103 = arith.addf %102, %95 : vector<8x512xf32>
    %cst_11 = arith.constant 0.111111112 : f32
    %104 = vector.broadcast %cst_11 : f32 to vector<8x512xf32>
    %105 = arith.mulf %103, %104 : vector<8x512xf32>
    %106 = vector.broadcast %2 : vector<1x512xf32> to vector<8x512xf32>
    %107 = arith.mulf %105, %106 : vector<8x512xf32>
    %108 = vector.extract_strided_slice %107 {offsets = [0, 509], sizes = [8, 3], strides = [1, 1]} : vector<8x512xf32> to vector<8x3xf32>
    %109 = vector.extract_strided_slice %107 {offsets = [0, 0], sizes = [8, 509], strides = [1, 1]} : vector<8x512xf32> to vector<8x509xf32>
    %110 = tpu.concatenate %108, %109 in 1 : vector<8x3xf32>, vector<8x509xf32> -> vector<8x512xf32>
    %111 = vector.extract_strided_slice %107 {offsets = [0, 3], sizes = [8, 509], strides = [1, 1]} : vector<8x512xf32> to vector<8x509xf32>
    %112 = vector.extract_strided_slice %107 {offsets = [0, 0], sizes = [8, 3], strides = [1, 1]} : vector<8x512xf32> to vector<8x3xf32>
    %113 = tpu.concatenate %111, %112 in 1 : vector<8x509xf32>, vector<8x3xf32> -> vector<8x512xf32>
    %114 = vector.extract_strided_slice %107 {offsets = [0, 446], sizes = [8, 66], strides = [1, 1]} : vector<8x512xf32> to vector<8x66xf32>
    %115 = vector.extract_strided_slice %107 {offsets = [0, 0], sizes = [8, 446], strides = [1, 1]} : vector<8x512xf32> to vector<8x446xf32>
    %116 = tpu.concatenate %114, %115 in 1 : vector<8x66xf32>, vector<8x446xf32> -> vector<8x512xf32>
    %117 = vector.extract_strided_slice %107 {offsets = [0, 66], sizes = [8, 446], strides = [1, 1]} : vector<8x512xf32> to vector<8x446xf32>
    %118 = vector.extract_strided_slice %107 {offsets = [0, 0], sizes = [8, 66], strides = [1, 1]} : vector<8x512xf32> to vector<8x66xf32>
    %119 = tpu.concatenate %117, %118 in 1 : vector<8x446xf32>, vector<8x66xf32> -> vector<8x512xf32>
    %120 = vector.extract_strided_slice %107 {offsets = [0, 443], sizes = [8, 69], strides = [1, 1]} : vector<8x512xf32> to vector<8x69xf32>
    %121 = vector.extract_strided_slice %107 {offsets = [0, 0], sizes = [8, 443], strides = [1, 1]} : vector<8x512xf32> to vector<8x443xf32>
    %122 = tpu.concatenate %120, %121 in 1 : vector<8x69xf32>, vector<8x443xf32> -> vector<8x512xf32>
    %123 = vector.extract_strided_slice %107 {offsets = [0, 449], sizes = [8, 63], strides = [1, 1]} : vector<8x512xf32> to vector<8x63xf32>
    %124 = vector.extract_strided_slice %107 {offsets = [0, 0], sizes = [8, 449], strides = [1, 1]} : vector<8x512xf32> to vector<8x449xf32>
    %125 = tpu.concatenate %123, %124 in 1 : vector<8x63xf32>, vector<8x449xf32> -> vector<8x512xf32>
    %126 = vector.extract_strided_slice %107 {offsets = [0, 63], sizes = [8, 449], strides = [1, 1]} : vector<8x512xf32> to vector<8x449xf32>
    %127 = vector.extract_strided_slice %107 {offsets = [0, 0], sizes = [8, 63], strides = [1, 1]} : vector<8x512xf32> to vector<8x63xf32>
    %128 = tpu.concatenate %126, %127 in 1 : vector<8x449xf32>, vector<8x63xf32> -> vector<8x512xf32>
    %129 = vector.extract_strided_slice %107 {offsets = [0, 69], sizes = [8, 443], strides = [1, 1]} : vector<8x512xf32> to vector<8x443xf32>
    %130 = vector.extract_strided_slice %107 {offsets = [0, 0], sizes = [8, 69], strides = [1, 1]} : vector<8x512xf32> to vector<8x69xf32>
    %131 = tpu.concatenate %129, %130 in 1 : vector<8x443xf32>, vector<8x69xf32> -> vector<8x512xf32>
    %132 = tpu.concatenate %74, %77, %80, %83, %71, %86, %89, %92, %95, %110, %113, %116, %119, %122, %125, %128 in 0 : vector<8x512xf32>, vector<8x512xf32>, vector<8x512xf32>, vector<8x512xf32>, vector<8x512xf32>, vector<8x512xf32>, vector<8x512xf32>, vector<8x512xf32>, vector<8x512xf32>, vector<8x512xf32>, vector<8x512xf32>, vector<8x512xf32>, vector<8x512xf32>, vector<8x512xf32>, vector<8x512xf32>, vector<8x512xf32> -> vector<128x512xf32>
    %133 = tpu.concatenate %132, %131 in 0 : vector<128x512xf32>, vector<8x512xf32> -> vector<136x512xf32>
    %cst_12 = arith.constant dense<0.000000e+00> : vector<8x512xf32>
    %134 = tpu.matmul %0, %133, %cst_12 {dimension_numbers = #tpu.dot_dimension_numbers<[1], [0], [0], [1], [0, 0, 1, 1], [], []>} : vector<8x136xf32>, vector<136x512xf32>, vector<8x512xf32> -> vector<8x512xf32>
    %135 = vector.broadcast %1 : vector<8x1xf32> to vector<8x512xf32>
    %136 = arith.addf %134, %135 : vector<8x512xf32>
    %137 = vector.broadcast %2 : vector<1x512xf32> to vector<8x512xf32>
    %138 = arith.mulf %69, %137 : vector<8x512xf32>
    %139 = vector.broadcast %2 : vector<1x512xf32> to vector<8x512xf32>
    %140 = arith.mulf %136, %139 : vector<8x512xf32>
    %141 = arith.addf %138, %140 : vector<8x512xf32>
    %cst_13 = arith.constant dense<0.000000e+00> : vector<8xf32>
    %142 = vector.multi_reduction <add>, %141, %cst_13 [1] : vector<8x512xf32> to vector<8xf32>
    %143 = vector.shape_cast %142 : vector<8xf32> to vector<8x1xf32>
    %cst_14 = arith.constant 0.001953125 : f32
    %144 = vector.broadcast %cst_14 : f32 to vector<8x1xf32>
    %145 = arith.mulf %143, %144 : vector<8x1xf32>
    %146 = vector.broadcast %145 : vector<8x1xf32> to vector<8x512xf32>
    %147 = arith.subf %69, %146 : vector<8x512xf32>
    %148 = vector.broadcast %2 : vector<1x512xf32> to vector<8x512xf32>
    %149 = arith.mulf %147, %148 : vector<8x512xf32>
    %150 = arith.mulf %149, %149 : vector<8x512xf32>
    %cst_15 = arith.constant dense<0.000000e+00> : vector<8xf32>
    %151 = vector.multi_reduction <add>, %150, %cst_15 [1] : vector<8x512xf32> to vector<8xf32>
    %152 = vector.shape_cast %151 : vector<8xf32> to vector<8x1xf32>
    %153 = vector.broadcast %145 : vector<8x1xf32> to vector<8x512xf32>
    %154 = arith.subf %136, %153 : vector<8x512xf32>
    %155 = vector.broadcast %2 : vector<1x512xf32> to vector<8x512xf32>
    %156 = arith.mulf %154, %155 : vector<8x512xf32>
    %157 = arith.mulf %156, %156 : vector<8x512xf32>
    %cst_16 = arith.constant dense<0.000000e+00> : vector<8xf32>
    %158 = vector.multi_reduction <add>, %157, %cst_16 [1] : vector<8x512xf32> to vector<8xf32>
    %159 = vector.shape_cast %158 : vector<8xf32> to vector<8x1xf32>
    %160 = arith.addf %152, %159 : vector<8x1xf32>
    %cst_17 = arith.constant 0.001953125 : f32
    %161 = vector.broadcast %cst_17 : f32 to vector<8x1xf32>
    %162 = arith.mulf %160, %161 : vector<8x1xf32>
    %c0_18 = arith.constant 0 : index
    %c0_19 = arith.constant 0 : index
    %163 = vector.load %arg4[%c0_18, %c0_19] : memref<8x1xf32, #tpu.memory_space<vmem>>, vector<8x1xf32>
    %cst_20 = arith.constant 9.99999974E-6 : f32
    %164 = vector.broadcast %cst_20 : f32 to vector<8x1xf32>
    %165 = arith.addf %162, %164 : vector<8x1xf32>
    %166 = math.rsqrt %165 : vector<8x1xf32>
    %167 = arith.mulf %163, %166 : vector<8x1xf32>
    %c0_21 = arith.constant 0 : index
    %c0_22 = arith.constant 0 : index
    %168 = vector.load %arg5[%c0_21, %c0_22] : memref<8x1xf32, #tpu.memory_space<vmem>>, vector<8x1xf32>
    %169 = arith.mulf %145, %167 : vector<8x1xf32>
    %170 = arith.subf %168, %169 : vector<8x1xf32>
    %171 = vector.broadcast %167 : vector<8x1xf32> to vector<8x512xf32>
    %172 = arith.mulf %69, %171 : vector<8x512xf32>
    %173 = vector.broadcast %170 : vector<8x1xf32> to vector<8x512xf32>
    %174 = arith.addf %172, %173 : vector<8x512xf32>
    %cst_23 = arith.constant 0.000000e+00 : f32
    %175 = vector.broadcast %cst_23 : f32 to vector<8x512xf32>
    %176 = arith.maximumf %174, %175 : vector<8x512xf32>
    %c0_24 = arith.constant 0 : index
    %c0_25 = arith.constant 0 : index
    %c0_26 = arith.constant 0 : index
    %177 = vector.load %arg6[%c0_24, %c0_25, %c0_26] : memref<2x8x512xf32, #tpu.memory_space<vmem>>, vector<1x8x512xf32>
    %178 = vector.shape_cast %177 : vector<1x8x512xf32> to vector<8x512xf32>
    %179 = vector.shape_cast %176 : vector<8x512xf32> to vector<1x8x512xf32>
    tpu.vector_store %arg6[%c0_24, %c0_25, %c0_26], %179 {strides = array<i32>} : memref<2x8x512xf32, #tpu.memory_space<vmem>>, vector<1x8x512xf32>,
    %180 = vector.broadcast %167 : vector<8x1xf32> to vector<8x512xf32>
    %181 = arith.mulf %136, %180 : vector<8x512xf32>
    %182 = vector.broadcast %170 : vector<8x1xf32> to vector<8x512xf32>
    %183 = arith.addf %181, %182 : vector<8x512xf32>
    %cst_27 = arith.constant 0.000000e+00 : f32
    %184 = vector.broadcast %cst_27 : f32 to vector<8x512xf32>
    %185 = arith.maximumf %183, %184 : vector<8x512xf32>
    %c1_28 = arith.constant 1 : index
    %c0_29 = arith.constant 0 : index
    %c0_30 = arith.constant 0 : index
    %186 = vector.load %arg6[%c1_28, %c0_29, %c0_30] : memref<2x8x512xf32, #tpu.memory_space<vmem>>, vector<1x8x512xf32>
    %187 = vector.shape_cast %186 : vector<1x8x512xf32> to vector<8x512xf32>
    %188 = vector.shape_cast %185 : vector<8x512xf32> to vector<1x8x512xf32>
    tpu.vector_store %arg6[%c1_28, %c0_29, %c0_30], %188 {strides = array<i32>} : memref<2x8x512xf32, #tpu.memory_space<vmem>>, vector<1x8x512xf32>,
    return
  }
}

</mosaic_0001>

<llo_original>
// kernel: large_field_9_forward.1
$region0: #{large_field_9_forward.1}
  #allocation0 [shape = 'u32[]', space=smem, size = 0x4, offset = 0x4, fixed_abs, tag = 'smem constant byte address 0x4 - core index']
  #allocation1 [shape = 'u32[144,128]{1,0:T(1,128)}', space=vmem, size = 0x12000, scoped, tag = 'internal scratch']
  %s0 = inlined_call_operand.vmem [shape: f32[2,8,512], index: 0, kind: input, shape index: {}]
  %s1 = inlined_call_operand.vmem [shape: f32[8,136], index: 1, kind: input, shape index: {}]
  %s2 = inlined_call_operand.vmem [shape: f32[8,1], index: 2, kind: input, shape index: {}]
  %s3 = inlined_call_operand.vmem [shape: f32[1,512], index: 3, kind: input, shape index: {}]
  %s4 = inlined_call_operand.vmem [shape: f32[8,1], index: 4, kind: input, shape index: {}]
  %s5 = inlined_call_operand.vmem [shape: f32[8,1], index: 5, kind: input, shape index: {}]
  %s6 = inlined_call_operand.vmem [shape: f32[2,8,512], index: 6, kind: output, shape index: {}]
  %s7 = sld [smem:[#allocation0]]
  $region34: #{large_field_9_forward.1} parent=0
    _
  %s9 = ssub.s32 1, %s7
  %s10 = scalar_select 0, %s9, %s7
  // Predicated region
  $region2: #{large_field_9_forward.1} parent=0 // pred_check
    _
  $region3: #{large_field_9_forward.1} parent=0 // pred_check_branch
    %12 = sbr.rel (0) target = $region5
  $region4: #{large_field_9_forward.1} parent=0 // pred_region
    _
  $region5: #{large_field_9_forward.1} parent=0 // pred_fallthru
    _
  // Predicated region
  $region6: #{large_field_9_forward.1} parent=0 // pred_check
    _
  $region7: #{large_field_9_forward.1} parent=0 // pred_check_branch
    %14 = sbr.rel (0) target = $region9
  $region8: #{large_field_9_forward.1} parent=0 // pred_region
    _
  $region9: #{large_field_9_forward.1} parent=0 // pred_fallthru
    _
  // Predicated region
  $region10: #{large_field_9_forward.1} parent=0 // pred_check
    _
  $region11: #{large_field_9_forward.1} parent=0 // pred_check_branch
    %16 = sbr.rel (0) target = $region13
  $region12: #{large_field_9_forward.1} parent=0 // pred_region
    _
  $region13: #{large_field_9_forward.1} parent=0 // pred_fallthru
    _
  // Predicated region
  $region14: #{large_field_9_forward.1} parent=0 // pred_check
    _
  $region15: #{large_field_9_forward.1} parent=0 // pred_check_branch
    %18 = sbr.rel (0) target = $region17
  $region16: #{large_field_9_forward.1} parent=0 // pred_region
    _
  $region17: #{large_field_9_forward.1} parent=0 // pred_fallthru
    _
  // Predicated region
  $region18: #{large_field_9_forward.1} parent=0 // pred_check
    _
  $region19: #{large_field_9_forward.1} parent=0 // pred_check_branch
    %20 = sbr.rel (0) target = $region21
  $region20: #{large_field_9_forward.1} parent=0 // pred_region
    _
  $region21: #{large_field_9_forward.1} parent=0 // pred_fallthru
    _
  // Predicated region
  $region22: #{large_field_9_forward.1} parent=0 // pred_check
    _
  $region23: #{large_field_9_forward.1} parent=0 // pred_check_branch
    %22 = sbr.rel (0) target = $region25
  $region24: #{large_field_9_forward.1} parent=0 // pred_region
    _
  $region25: #{large_field_9_forward.1} parent=0 // pred_fallthru
    _
  %v23 = vld [vmem:[%s1] sm:$0xff]
  %v24 = vld [vmem:[%s1 + $0x8] sm:$0xff]
  %v25 = vld [vmem:[%s2] sm:$0xff]
  %v26 = vld [vmem:[%s3] sm:$0xf]
  %v27 = vld [vmem:[%s0] sm:$0xff]
  %v28 = vld [vmem:[%s0 + $0x8] sm:$0xff]
  %v29 = vld [vmem:[%s0 + $0x10] sm:$0xff]
  %v30 = vld [vmem:[%s0 + $0x18] sm:$0xff]
  %32 = vrot.lane.b32.xlu0 %v30, 23
  %v33 = vpop.permute.xlu0 %32
  %38 = vrot.lane.b32.xlu0 %v27, 23
  %v39 = vpop.permute.xlu0 %38
  %40 = vrot.lane.b32.xlu0 %v28, 23
  %v41 = vpop.permute.xlu0 %40
  %42 = vrot.lane.b32.xlu0 %v29, 23
  %v43 = vpop.permute.xlu0 %42
  %vm44 = vcmask 187392
  %v45 = vsel %vm44, %v39, %v41
  %v46 = vsel %vm44, %v41, %v43
  %v47 = vsel %vm44, %v43, %v33
  %v52 = vsel %vm44, %v33, %v39
  %53 = vrot.lane.b32.xlu0 %v30, 22
  %v54 = vpop.permute.xlu0 %53
  %56 = vrot.lane.b32.xlu0 %v27, 22
  %v57 = vpop.permute.xlu0 %56
  %58 = vrot.lane.b32.xlu0 %v28, 22
  %v59 = vpop.permute.xlu0 %58
  %60 = vrot.lane.b32.xlu0 %v29, 22
  %v61 = vpop.permute.xlu0 %60
  %vm62 = vcmask 179200
  %v63 = vsel %vm62, %v57, %v59
  %v64 = vsel %vm62, %v59, %v61
  %v65 = vsel %vm62, %v61, %v54
  %v70 = vsel %vm62, %v54, %v57
  %71 = vrot.lane.b32.xlu0 %v30, 21
  %v72 = vpop.permute.xlu0 %71
  %74 = vrot.lane.b32.xlu0 %v27, 21
  %v75 = vpop.permute.xlu0 %74
  %76 = vrot.lane.b32.xlu0 %v28, 21
  %v77 = vpop.permute.xlu0 %76
  %78 = vrot.lane.b32.xlu0 %v29, 21
  %v79 = vpop.permute.xlu0 %78
  %vm80 = vcmask 171008
  %v81 = vsel %vm80, %v75, %v77
  %v82 = vsel %vm80, %v77, %v79
  %v83 = vsel %vm80, %v79, %v72
  %v88 = vsel %vm80, %v72, %v75
  %89 = vrot.lane.b32.xlu0 %v30, 1
  %v90 = vpop.permute.xlu0 %89
  %92 = vrot.lane.b32.xlu0 %v27, 1
  %v93 = vpop.permute.xlu0 %92
  %94 = vrot.lane.b32.xlu0 %v28, 1
  %v95 = vpop.permute.xlu0 %94
  %96 = vrot.lane.b32.xlu0 %v29, 1
  %v97 = vpop.permute.xlu0 %96
  %vm98 = vcmask 7168
  %v99 = vsel %vm98, %v93, %v95
  %v100 = vsel %vm98, %v95, %v97
  %v101 = vsel %vm98, %v97, %v90
  %v106 = vsel %vm98, %v90, %v93
  %107 = vrot.lane.b32.xlu0 %v27, 127
  %v108 = vpop.permute.xlu0 %107
  %109 = vrot.lane.b32.xlu0 %v28, 127
  %v110 = vpop.permute.xlu0 %109
  %111 = vrot.lane.b32.xlu0 %v29, 127
  %v112 = vpop.permute.xlu0 %111
  %113 = vrot.lane.b32.xlu0 %v30, 127
  %v114 = vpop.permute.xlu0 %113
  %vm115 = vcmask 1039360
  %v116 = vsel %vm115, %v108, %v110
  %v117 = vsel %vm115, %v110, %v112
  %v118 = vsel %vm115, %v112, %v114
  %v124 = vsel %vm115, %v114, %v108
  %125 = vrot.lane.b32.xlu0 %v27, 107
  %v126 = vpop.permute.xlu0 %125
  %127 = vrot.lane.b32.xlu0 %v28, 107
  %v128 = vpop.permute.xlu0 %127
  %129 = vrot.lane.b32.xlu0 %v29, 107
  %v130 = vpop.permute.xlu0 %129
  %131 = vrot.lane.b32.xlu0 %v30, 107
  %v132 = vpop.permute.xlu0 %131
  %vm133 = vcmask 875520
  %v134 = vsel %vm133, %v126, %v128
  %v135 = vsel %vm133, %v128, %v130
  %v136 = vsel %vm133, %v130, %v132
  %v142 = vsel %vm133, %v132, %v126
  %143 = vrot.lane.b32.xlu0 %v27, 106
  %v144 = vpop.permute.xlu0 %143
  %145 = vrot.lane.b32.xlu0 %v28, 106
  %v146 = vpop.permute.xlu0 %145
  %147 = vrot.lane.b32.xlu0 %v29, 106
  %v148 = vpop.permute.xlu0 %147
  %149 = vrot.lane.b32.xlu0 %v30, 106
  %v150 = vpop.permute.xlu0 %149
  %vm151 = vcmask 867328
  %v152 = vsel %vm151, %v144, %v146
  %v153 = vsel %vm151, %v146, %v148
  %v154 = vsel %vm151, %v148, %v150
  %v160 = vsel %vm151, %v150, %v144
  %161 = vrot.lane.b32.xlu0 %v27, 105
  %v162 = vpop.permute.xlu0 %161
  %163 = vrot.lane.b32.xlu0 %v28, 105
  %v164 = vpop.permute.xlu0 %163
  %165 = vrot.lane.b32.xlu0 %v29, 105
  %v166 = vpop.permute.xlu0 %165
  %167 = vrot.lane.b32.xlu0 %v30, 105
  %v168 = vpop.permute.xlu0 %167
  %vm169 = vcmask 859136
  %v170 = vsel %vm169, %v162, %v164
  %v171 = vsel %vm169, %v164, %v166
  %v172 = vsel %vm169, %v166, %v168
  %v178 = vsel %vm169, %v168, %v162
  %v179 = vadd.f32 %v52, %v70
  %v180 = vadd.f32 %v45, %v63
  %v181 = vadd.f32 %v46, %v64
  %v182 = vadd.f32 %v47, %v65
  %v183 = vadd.f32 %v179, %v88
  %v184 = vadd.f32 %v180, %v81
  %v185 = vadd.f32 %v181, %v82
  %v186 = vadd.f32 %v182, %v83
  %v187 = vadd.f32 %v183, %v106
  %v188 = vadd.f32 %v184, %v99
  %v189 = vadd.f32 %v185, %v100
  %v190 = vadd.f32 %v186, %v101
  %v191 = vadd.f32 %v187, %v27
  %v192 = vadd.f32 %v188, %v28
  %v193 = vadd.f32 %v189, %v29
  %v194 = vadd.f32 %v190, %v30
  %v195 = vadd.f32 %v191, %v116
  %v196 = vadd.f32 %v192, %v117
  %v197 = vadd.f32 %v193, %v118
  %v198 = vadd.f32 %v194, %v124
  %v199 = vadd.f32 %v195, %v134
  %v200 = vadd.f32 %v196, %v135
  %v201 = vadd.f32 %v197, %v136
  %v202 = vadd.f32 %v198, %v142
  %v203 = vadd.f32 %v199, %v152
  %v204 = vadd.f32 %v200, %v153
  %v205 = vadd.f32 %v201, %v154
  %v206 = vadd.f32 %v202, %v160
  %v207 = vadd.f32 %v203, %v170
  %v208 = vadd.f32 %v204, %v171
  %v209 = vadd.f32 %v205, %v172
  %v210 = vadd.f32 %v206, %v178
  %v211 = vmul.f32 %v207, 0.11111111
  %v212 = vmul.f32 %v208, 0.11111111
  %v213 = vmul.f32 %v209, 0.11111111
  %v214 = vmul.f32 %v210, 0.11111111
  %v216 = vlaneseq
  %v217 = vshrl.u32 %v216, 7
  %v218 = vsub.s32 0, %v217
  %v219 = vrot.slane %v26, %v218
  %v220 = vlaneseq
  %v221 = vshrl.u32 %v220, 7
  %v222 = vsub.s32 1, %v221
  %v223 = vrot.slane %v26, %v222
  %v224 = vlaneseq
  %v225 = vshrl.u32 %v224, 7
  %v226 = vsub.s32 2, %v225
  %v227 = vrot.slane %v26, %v226
  %v228 = vlaneseq
  %v229 = vshrl.u32 %v228, 7
  %v230 = vsub.s32 3, %v229
  %v231 = vrot.slane %v26, %v230
  %v236 = vmul.f32 %v211, %v219
  %v237 = vmul.f32 %v212, %v223
  %v238 = vmul.f32 %v213, %v227
  %v239 = vmul.f32 %v214, %v231
  %241 = vrot.lane.b32.xlu0 %v239, 3
  %v242 = vpop.permute.xlu0 %241
  %247 = vrot.lane.b32.xlu0 %v236, 3
  %v248 = vpop.permute.xlu0 %247
  %249 = vrot.lane.b32.xlu0 %v237, 3
  %v250 = vpop.permute.xlu0 %249
  %251 = vrot.lane.b32.xlu0 %v238, 3
  %v252 = vpop.permute.xlu0 %251
  %vm253 = vcmask 23552
  %v254 = vsel %vm253, %v248, %v250
  %v255 = vsel %vm253, %v250, %v252
  %v256 = vsel %vm253, %v252, %v242
  %v261 = vsel %vm253, %v242, %v248
  %262 = vrot.lane.b32.xlu0 %v236, 125
  %v263 = vpop.permute.xlu0 %262
  %264 = vrot.lane.b32.xlu0 %v237, 125
  %v265 = vpop.permute.xlu0 %264
  %266 = vrot.lane.b32.xlu0 %v238, 125
  %v267 = vpop.permute.xlu0 %266
  %268 = vrot.lane.b32.xlu0 %v239, 125
  %v269 = vpop.permute.xlu0 %268
  %vm270 = vcmask 1022976
  %v271 = vsel %vm270, %v263, %v265
  %v272 = vsel %vm270, %v265, %v267
  %v273 = vsel %vm270, %v267, %v269
  %v279 = vsel %vm270, %v269, %v263
  %280 = vrot.lane.b32.xlu0 %v239, 66
  %v281 = vpop.permute.xlu0 %280
  %283 = vrot.lane.b32.xlu0 %v236, 66
  %v284 = vpop.permute.xlu0 %283
  %285 = vrot.lane.b32.xlu0 %v237, 66
  %v286 = vpop.permute.xlu0 %285
  %287 = vrot.lane.b32.xlu0 %v238, 66
  %v288 = vpop.permute.xlu0 %287
  %vm289 = vcmask 539648
  %v290 = vsel %vm289, %v284, %v286
  %v291 = vsel %vm289, %v286, %v288
  %v292 = vsel %vm289, %v288, %v281
  %v297 = vsel %vm289, %v281, %v284
  %298 = vrot.lane.b32.xlu0 %v236, 62
  %v299 = vpop.permute.xlu0 %298
  %300 = vrot.lane.b32.xlu0 %v237, 62
  %v301 = vpop.permute.xlu0 %300
  %302 = vrot.lane.b32.xlu0 %v238, 62
  %v303 = vpop.permute.xlu0 %302
  %304 = vrot.lane.b32.xlu0 %v239, 62
  %v305 = vpop.permute.xlu0 %304
  %vm306 = vcmask 506880
  %v307 = vsel %vm306, %v299, %v301
  %v308 = vsel %vm306, %v301, %v303
  %v309 = vsel %vm306, %v303, %v305
  %v315 = vsel %vm306, %v305, %v299
  %316 = vrot.lane.b32.xlu0 %v239, 69
  %v317 = vpop.permute.xlu0 %316
  %319 = vrot.lane.b32.xlu0 %v236, 69
  %v320 = vpop.permute.xlu0 %319
  %321 = vrot.lane.b32.xlu0 %v237, 69
  %v322 = vpop.permute.xlu0 %321
  %323 = vrot.lane.b32.xlu0 %v238, 69
  %v324 = vpop.permute.xlu0 %323
  %vm325 = vcmask 564224
  %v326 = vsel %vm325, %v320, %v322
  %v327 = vsel %vm325, %v322, %v324
  %v328 = vsel %vm325, %v324, %v317
  %v333 = vsel %vm325, %v317, %v320
  %334 = vrot.lane.b32.xlu0 %v239, 63
  %v335 = vpop.permute.xlu0 %334
  %337 = vrot.lane.b32.xlu0 %v236, 63
  %v338 = vpop.permute.xlu0 %337
  %339 = vrot.lane.b32.xlu0 %v237, 63
  %v340 = vpop.permute.xlu0 %339
  %341 = vrot.lane.b32.xlu0 %v238, 63
  %v342 = vpop.permute.xlu0 %341
  %vm343 = vcmask 515072
  %v344 = vsel %vm343, %v338, %v340
  %v345 = vsel %vm343, %v340, %v342
  %v346 = vsel %vm343, %v342, %v335
  %v351 = vsel %vm343, %v335, %v338
  %352 = vrot.lane.b32.xlu0 %v236, 65
  %v353 = vpop.permute.xlu0 %352
  %354 = vrot.lane.b32.xlu0 %v237, 65
  %v355 = vpop.permute.xlu0 %354
  %356 = vrot.lane.b32.xlu0 %v238, 65
  %v357 = vpop.permute.xlu0 %356
  %358 = vrot.lane.b32.xlu0 %v239, 65
  %v359 = vpop.permute.xlu0 %358
  %vm360 = vcmask 531456
  %v361 = vsel %vm360, %v353, %v355
  %v362 = vsel %vm360, %v355, %v357
  %v363 = vsel %vm360, %v357, %v359
  %v369 = vsel %vm360, %v359, %v353
  %370 = vrot.lane.b32.xlu0 %v236, 59
  %v371 = vpop.permute.xlu0 %370
  %372 = vrot.lane.b32.xlu0 %v237, 59
  %v373 = vpop.permute.xlu0 %372
  %374 = vrot.lane.b32.xlu0 %v238, 59
  %v375 = vpop.permute.xlu0 %374
  %376 = vrot.lane.b32.xlu0 %v239, 59
  %v377 = vpop.permute.xlu0 %376
  %vm378 = vcmask 482304
  %v379 = vsel %vm378, %v371, %v373
  %v380 = vsel %vm378, %v373, %v375
  %v381 = vsel %vm378, %v375, %v377
  %v387 = vsel %vm378, %v377, %v371
  %389 = vset.pattern.permute.xlu0 0
  %390 = vperm.xlu0 %389, %v25
  %v391 = vpop.permute.xlu0 %390
  %vm393 = vcmask 64512
  %v395 = vsel %vm393, %v24, 0
  %397 = vmatprep.subr.mxu0 %v45
  %398 = vmatpush1.msra.mxu0 %v52
  %399 = vmatprep.subr.mxu0 %v63
  %400 = vmatpush1.msra.mxu0 %v70
  %401 = vmatprep.subr.mxu0 %v81
  %402 = vmatpush1.msra.mxu0 %v88
  %403 = vmatprep.subr.mxu0 %v99
  %404 = vmatpush1.msra.mxu0 %v106
  %405 = vmatprep.subr.mxu0 %v28
  %406 = vmatpush1.msra.mxu0 %v27
  %407 = vmatprep.subr.mxu0 %v117
  %408 = vmatpush1.msra.mxu0 %v116
  %409 = vmatprep.subr.mxu0 %v135
  %410 = vmatpush1.msra.mxu0 %v134
  %411 = vmatprep.subr.mxu0 %v153
  %412 = vmatpush1.msra.mxu0 %v152
  %413 = vmatprep.subr.mxu0 %v171
  %414 = vmatpush1.msra.mxu0 %v170
  %415 = vmatprep.subr.mxu0 %v254
  %416 = vmatpush1.msra.mxu0 %v261
  %417 = vmatprep.subr.mxu0 %v272
  %418 = vmatpush1.msra.mxu0 %v271
  %419 = vmatprep.subr.mxu0 %v290
  %420 = vmatpush1.msra.mxu0 %v297
  %421 = vmatprep.subr.mxu0 %v308
  %422 = vmatpush1.msra.mxu0 %v307
  %423 = vmatprep.subr.mxu0 %v326
  %424 = vmatpush1.msra.mxu0 %v333
  %425 = vmatprep.subr.mxu0 %v344
  %426 = vmatpush1.msra.mxu0 %v351
  %427 = vmatprep.subr.mxu0 %v362
  %428 = vmatpush1.msra.mxu0 %v361
  %429 = vmatprep.subr.mxu0 %v380
  %430 = vmatpush1.msra.mxu0 %v379
  %431 = vmatprep.subr.mxu0 0.0
  %432 = vmatpush1.msra.mxu0 0.0
  %433 = vmatprep.subr.mxu0 0.0
  %434 = vmatpush1.msra.mxu0 0.0
  %435 = vmatprep.subr.mxu0 0.0
  %436 = vmatpush1.msra.mxu0 0.0
  %437 = vmatprep.subr.mxu0 0.0
  %438 = vmatpush1.msra.mxu0 0.0
  %439 = vmatprep.subr.mxu0 0.0
  %440 = vmatpush1.msra.mxu0 0.0
  %441 = vmatprep.subr.mxu0 0.0
  %442 = vmatpush1.msra.mxu0 0.0
  %443 = vmatprep.subr.mxu0 0.0
  %444 = vmatpush1.msra.mxu0 0.0
  %445 = vmatprep.subr.mxu0 0.0
  %446 = vmatpush1.msra.mxu0 0.0
  %447 = vmatprep.subr.mxu0 0.0
  %448 = vmatpush1.msra.mxu0 0.0
  %449 = vmatprep.subr.mxu0 0.0
  %450 = vmatpush1.msra.mxu0 0.0
  %451 = vmatprep.subr.mxu0 0.0
  %452 = vmatpush1.msra.mxu0 0.0
  %453 = vmatprep.subr.mxu0 0.0
  %454 = vmatpush1.msra.mxu0 0.0
  %455 = vmatprep.subr.mxu0 0.0
  %456 = vmatpush1.msra.mxu0 0.0
  %457 = vmatprep.subr.mxu0 0.0
  %458 = vmatpush1.msra.mxu0 0.0
  %459 = vmatprep.subr.mxu0 0.0
  %460 = vmatpush1.msra.mxu0 0.0
  %461 = vmatprep.mubr.f32.mxu0 %v395
  %462 = vmatmul.mubr.f32.gmra.mrb[0].mxu0 %v23
  %v463 = vpop.f32.mrb[0].mxu0
  %v464 = vadd.f32 %v391, %v463
  %v465 = vpop.f32.mrb[0].mxu0
  %v466 = vadd.f32 %v391, %v465
  %467 = vdwg.mxu0
  %468 = vmatprep.subr.mxu0 %v47
  %469 = vmatpush1.msra.mxu0 %v46
  %470 = vmatprep.subr.mxu0 %v65
  %471 = vmatpush1.msra.mxu0 %v64
  %472 = vmatprep.subr.mxu0 %v83
  %473 = vmatpush1.msra.mxu0 %v82
  %474 = vmatprep.subr.mxu0 %v101
  %475 = vmatpush1.msra.mxu0 %v100
  %476 = vmatprep.subr.mxu0 %v30
  %477 = vmatpush1.msra.mxu0 %v29
  %478 = vmatprep.subr.mxu0 %v124
  %479 = vmatpush1.msra.mxu0 %v118
  %480 = vmatprep.subr.mxu0 %v142
  %481 = vmatpush1.msra.mxu0 %v136
  %482 = vmatprep.subr.mxu0 %v160
  %483 = vmatpush1.msra.mxu0 %v154
  %484 = vmatprep.subr.mxu0 %v178
  %485 = vmatpush1.msra.mxu0 %v172
  %486 = vmatprep.subr.mxu0 %v256
  %487 = vmatpush1.msra.mxu0 %v255
  %488 = vmatprep.subr.mxu0 %v279
  %489 = vmatpush1.msra.mxu0 %v273
  %490 = vmatprep.subr.mxu0 %v292
  %491 = vmatpush1.msra.mxu0 %v291
  %492 = vmatprep.subr.mxu0 %v315
  %493 = vmatpush1.msra.mxu0 %v309
  %494 = vmatprep.subr.mxu0 %v328
  %495 = vmatpush1.msra.mxu0 %v327
  %496 = vmatprep.subr.mxu0 %v346
  %497 = vmatpush1.msra.mxu0 %v345
  %498 = vmatprep.subr.mxu0 %v369
  %499 = vmatpush1.msra.mxu0 %v363
  %500 = vmatprep.subr.mxu0 %v387
  %501 = vmatpush1.msra.mxu0 %v381
  %502 = vmatprep.subr.mxu0 0.0
  %503 = vmatpush1.msra.mxu0 0.0
  %504 = vmatprep.subr.mxu0 0.0
  %505 = vmatpush1.msra.mxu0 0.0
  %506 = vmatprep.subr.mxu0 0.0
  %507 = vmatpush1.msra.mxu0 0.0
  %508 = vmatprep.subr.mxu0 0.0
  %509 = vmatpush1.msra.mxu0 0.0
  %510 = vmatprep.subr.mxu0 0.0
  %511 = vmatpush1.msra.mxu0 0.0
  %512 = vmatprep.subr.mxu0 0.0
  %513 = vmatpush1.msra.mxu0 0.0
  %514 = vmatprep.subr.mxu0 0.0
  %515 = vmatpush1.msra.mxu0 0.0
  %516 = vmatprep.subr.mxu0 0.0
  %517 = vmatpush1.msra.mxu0 0.0
  %518 = vmatprep.subr.mxu0 0.0
  %519 = vmatpush1.msra.mxu0 0.0
  %520 = vmatprep.subr.mxu0 0.0
  %521 = vmatpush1.msra.mxu0 0.0
  %522 = vmatprep.subr.mxu0 0.0
  %523 = vmatpush1.msra.mxu0 0.0
  %524 = vmatprep.subr.mxu0 0.0
  %525 = vmatpush1.msra.mxu0 0.0
  %526 = vmatprep.subr.mxu0 0.0
  %527 = vmatpush1.msra.mxu0 0.0
  %528 = vmatprep.subr.mxu0 0.0
  %529 = vmatpush1.msra.mxu0 0.0
  %530 = vmatprep.subr.mxu0 0.0
  %531 = vmatpush1.msra.mxu0 0.0
  %532 = vmatprep.mubr.f32.mxu0 %v395
  %533 = vmatmul.mubr.f32.gmra.mrb[0].mxu0 %v23
  %v534 = vpop.f32.mrb[0].mxu0
  %v535 = vadd.f32 %v391, %v534
  %v536 = vpop.f32.mrb[0].mxu0
  %v537 = vadd.f32 %v391, %v536
  %538 = vdwg.mxu0
  %s539 = scalar_lea.vmem %s0, 32
  %v540 = vld [vmem:[%s539] sm:$0xff]
  %v541 = vld [vmem:[%s539 + $0x8] sm:$0xff]
  %v542 = vld [vmem:[%s539 + $0x10] sm:$0xff]
  %v543 = vld [vmem:[%s539 + $0x18] sm:$0xff]
  %545 = vrot.lane.b32.xlu0 %v543, 23
  %v546 = vpop.permute.xlu0 %545
  %551 = vrot.lane.b32.xlu0 %v540, 23
  %v552 = vpop.permute.xlu0 %551
  %553 = vrot.lane.b32.xlu0 %v541, 23
  %v554 = vpop.permute.xlu0 %553
  %555 = vrot.lane.b32.xlu0 %v542, 23
  %v556 = vpop.permute.xlu0 %555
  %v557 = vsel %vm44, %v552, %v554
  %v558 = vsel %vm44, %v554, %v556
  %v559 = vsel %vm44, %v556, %v546
  %v564 = vsel %vm44, %v546, %v552
  %565 = vrot.lane.b32.xlu0 %v543, 22
  %v566 = vpop.permute.xlu0 %565
  %568 = vrot.lane.b32.xlu0 %v540, 22
  %v569 = vpop.permute.xlu0 %568
  %570 = vrot.lane.b32.xlu0 %v541, 22
  %v571 = vpop.permute.xlu0 %570
  %572 = vrot.lane.b32.xlu0 %v542, 22
  %v573 = vpop.permute.xlu0 %572
  %v574 = vsel %vm62, %v569, %v571
  %v575 = vsel %vm62, %v571, %v573
  %v576 = vsel %vm62, %v573, %v566
  %v581 = vsel %vm62, %v566, %v569
  %582 = vrot.lane.b32.xlu0 %v543, 21
  %v583 = vpop.permute.xlu0 %582
  %585 = vrot.lane.b32.xlu0 %v540, 21
  %v586 = vpop.permute.xlu0 %585
  %587 = vrot.lane.b32.xlu0 %v541, 21
  %v588 = vpop.permute.xlu0 %587
  %589 = vrot.lane.b32.xlu0 %v542, 21
  %v590 = vpop.permute.xlu0 %589
  %v591 = vsel %vm80, %v586, %v588
  %v592 = vsel %vm80, %v588, %v590
  %v593 = vsel %vm80, %v590, %v583
  %v598 = vsel %vm80, %v583, %v586
  %599 = vrot.lane.b32.xlu0 %v543, 1
  %v600 = vpop.permute.xlu0 %599
  %602 = vrot.lane.b32.xlu0 %v540, 1
  %v603 = vpop.permute.xlu0 %602
  %604 = vrot.lane.b32.xlu0 %v541, 1
  %v605 = vpop.permute.xlu0 %604
  %606 = vrot.lane.b32.xlu0 %v542, 1
  %v607 = vpop.permute.xlu0 %606
  %v608 = vsel %vm98, %v603, %v605
  %v609 = vsel %vm98, %v605, %v607
  %v610 = vsel %vm98, %v607, %v600
  %v615 = vsel %vm98, %v600, %v603
  %616 = vrot.lane.b32.xlu0 %v540, 127
  %v617 = vpop.permute.xlu0 %616
  %618 = vrot.lane.b32.xlu0 %v541, 127
  %v619 = vpop.permute.xlu0 %618
  %620 = vrot.lane.b32.xlu0 %v542, 127
  %v621 = vpop.permute.xlu0 %620
  %622 = vrot.lane.b32.xlu0 %v543, 127
  %v623 = vpop.permute.xlu0 %622
  %v624 = vsel %vm115, %v617, %v619
  %v625 = vsel %vm115, %v619, %v621
  %v626 = vsel %vm115, %v621, %v623
  %v632 = vsel %vm115, %v623, %v617
  %633 = vrot.lane.b32.xlu0 %v540, 107
  %v634 = vpop.permute.xlu0 %633
  %635 = vrot.lane.b32.xlu0 %v541, 107
  %v636 = vpop.permute.xlu0 %635
  %637 = vrot.lane.b32.xlu0 %v542, 107
  %v638 = vpop.permute.xlu0 %637
  %639 = vrot.lane.b32.xlu0 %v543, 107
  %v640 = vpop.permute.xlu0 %639
  %v641 = vsel %vm133, %v634, %v636
  %v642 = vsel %vm133, %v636, %v638
  %v643 = vsel %vm133, %v638, %v640
  %v649 = vsel %vm133, %v640, %v634
  %650 = vrot.lane.b32.xlu0 %v540, 106
  %v651 = vpop.permute.xlu0 %650
  %652 = vrot.lane.b32.xlu0 %v541, 106
  %v653 = vpop.permute.xlu0 %652
  %654 = vrot.lane.b32.xlu0 %v542, 106
  %v655 = vpop.permute.xlu0 %654
  %656 = vrot.lane.b32.xlu0 %v543, 106
  %v657 = vpop.permute.xlu0 %656
  %v658 = vsel %vm151, %v651, %v653
  %v659 = vsel %vm151, %v653, %v655
  %v660 = vsel %vm151, %v655, %v657
  %v666 = vsel %vm151, %v657, %v651
  %667 = vrot.lane.b32.xlu0 %v540, 105
  %v668 = vpop.permute.xlu0 %667
  %669 = vrot.lane.b32.xlu0 %v541, 105
  %v670 = vpop.permute.xlu0 %669
  %671 = vrot.lane.b32.xlu0 %v542, 105
  %v672 = vpop.permute.xlu0 %671
  %673 = vrot.lane.b32.xlu0 %v543, 105
  %v674 = vpop.permute.xlu0 %673
  %v675 = vsel %vm169, %v668, %v670
  %v676 = vsel %vm169, %v670, %v672
  %v677 = vsel %vm169, %v672, %v674
  %v683 = vsel %vm169, %v674, %v668
  %v684 = vadd.f32 %v564, %v581
  %v685 = vadd.f32 %v557, %v574
  %v686 = vadd.f32 %v558, %v575
  %v687 = vadd.f32 %v559, %v576
  %v688 = vadd.f32 %v684, %v598
  %v689 = vadd.f32 %v685, %v591
  %v690 = vadd.f32 %v686, %v592
  %v691 = vadd.f32 %v687, %v593
  %v692 = vadd.f32 %v688, %v615
  %v693 = vadd.f32 %v689, %v608
  %v694 = vadd.f32 %v690, %v609
  %v695 = vadd.f32 %v691, %v610
  %v696 = vadd.f32 %v692, %v540
  %v697 = vadd.f32 %v693, %v541
  %v698 = vadd.f32 %v694, %v542
  %v699 = vadd.f32 %v695, %v543
  %v700 = vadd.f32 %v696, %v624
  %v701 = vadd.f32 %v697, %v625
  %v702 = vadd.f32 %v698, %v626
  %v703 = vadd.f32 %v699, %v632
  %v704 = vadd.f32 %v700, %v641
  %v705 = vadd.f32 %v701, %v642
  %v706 = vadd.f32 %v702, %v643
  %v707 = vadd.f32 %v703, %v649
  %v708 = vadd.f32 %v704, %v658
  %v709 = vadd.f32 %v705, %v659
  %v710 = vadd.f32 %v706, %v660
  %v711 = vadd.f32 %v707, %v666
  %v712 = vadd.f32 %v708, %v675
  %v713 = vadd.f32 %v709, %v676
  %v714 = vadd.f32 %v710, %v677
  %v715 = vadd.f32 %v711, %v683
  %v716 = vmul.f32 %v712, 0.11111111
  %v717 = vmul.f32 %v713, 0.11111111
  %v718 = vmul.f32 %v714, 0.11111111
  %v719 = vmul.f32 %v715, 0.11111111
  %v720 = vmul.f32 %v716, %v219
  %v721 = vmul.f32 %v717, %v223
  %v722 = vmul.f32 %v718, %v227
  %v723 = vmul.f32 %v719, %v231
  %725 = vrot.lane.b32.xlu0 %v723, 3
  %v726 = vpop.permute.xlu0 %725
  %731 = vrot.lane.b32.xlu0 %v720, 3
  %v732 = vpop.permute.xlu0 %731
  %733 = vrot.lane.b32.xlu0 %v721, 3
  %v734 = vpop.permute.xlu0 %733
  %735 = vrot.lane.b32.xlu0 %v722, 3
  %v736 = vpop.permute.xlu0 %735
  %v737 = vsel %vm253, %v732, %v734
  %v738 = vsel %vm253, %v734, %v736
  %v739 = vsel %vm253, %v736, %v726
  %v744 = vsel %vm253, %v726, %v732
  %745 = vrot.lane.b32.xlu0 %v720, 125
  %v746 = vpop.permute.xlu0 %745
  %747 = vrot.lane.b32.xlu0 %v721, 125
  %v748 = vpop.permute.xlu0 %747
  %749 = vrot.lane.b32.xlu0 %v722, 125
  %v750 = vpop.permute.xlu0 %749
  %751 = vrot.lane.b32.xlu0 %v723, 125
  %v752 = vpop.permute.xlu0 %751
  %v753 = vsel %vm270, %v746, %v748
  %v754 = vsel %vm270, %v748, %v750
  %v755 = vsel %vm270, %v750, %v752
  %v761 = vsel %vm270, %v752, %v746
  %762 = vrot.lane.b32.xlu0 %v723, 66
  %v763 = vpop.permute.xlu0 %762
  %765 = vrot.lane.b32.xlu0 %v720, 66
  %v766 = vpop.permute.xlu0 %765
  %767 = vrot.lane.b32.xlu0 %v721, 66
  %v768 = vpop.permute.xlu0 %767
  %769 = vrot.lane.b32.xlu0 %v722, 66
  %v770 = vpop.permute.xlu0 %769
  %v771 = vsel %vm289, %v766, %v768
  %v772 = vsel %vm289, %v768, %v770
  %v773 = vsel %vm289, %v770, %v763
  %v778 = vsel %vm289, %v763, %v766
  %779 = vrot.lane.b32.xlu0 %v720, 62
  %v780 = vpop.permute.xlu0 %779
  %781 = vrot.lane.b32.xlu0 %v721, 62
  %v782 = vpop.permute.xlu0 %781
  %783 = vrot.lane.b32.xlu0 %v722, 62
  %v784 = vpop.permute.xlu0 %783
  %785 = vrot.lane.b32.xlu0 %v723, 62
  %v786 = vpop.permute.xlu0 %785
  %v787 = vsel %vm306, %v780, %v782
  %v788 = vsel %vm306, %v782, %v784
  %v789 = vsel %vm306, %v784, %v786
  %v795 = vsel %vm306, %v786, %v780
  %796 = vrot.lane.b32.xlu0 %v723, 69
  %v797 = vpop.permute.xlu0 %796
  %799 = vrot.lane.b32.xlu0 %v720, 69
  %v800 = vpop.permute.xlu0 %799
  %801 = vrot.lane.b32.xlu0 %v721, 69
  %v802 = vpop.permute.xlu0 %801
  %803 = vrot.lane.b32.xlu0 %v722, 69
  %v804 = vpop.permute.xlu0 %803
  %v805 = vsel %vm325, %v800, %v802
  %v806 = vsel %vm325, %v802, %v804
  %v807 = vsel %vm325, %v804, %v797
  %v812 = vsel %vm325, %v797, %v800
  %813 = vrot.lane.b32.xlu0 %v723, 63
  %v814 = vpop.permute.xlu0 %813
  %816 = vrot.lane.b32.xlu0 %v720, 63
  %v817 = vpop.permute.xlu0 %816
  %818 = vrot.lane.b32.xlu0 %v721, 63
  %v819 = vpop.permute.xlu0 %818
  %820 = vrot.lane.b32.xlu0 %v722, 63
  %v821 = vpop.permute.xlu0 %820
  %v822 = vsel %vm343, %v817, %v819
  %v823 = vsel %vm343, %v819, %v821
  %v824 = vsel %vm343, %v821, %v814
  %v829 = vsel %vm343, %v814, %v817
  %830 = vrot.lane.b32.xlu0 %v720, 65
  %v831 = vpop.permute.xlu0 %830
  %832 = vrot.lane.b32.xlu0 %v721, 65
  %v833 = vpop.permute.xlu0 %832
  %834 = vrot.lane.b32.xlu0 %v722, 65
  %v835 = vpop.permute.xlu0 %834
  %836 = vrot.lane.b32.xlu0 %v723, 65
  %v837 = vpop.permute.xlu0 %836
  %v838 = vsel %vm360, %v831, %v833
  %v839 = vsel %vm360, %v833, %v835
  %v840 = vsel %vm360, %v835, %v837
  %v846 = vsel %vm360, %v837, %v831
  %847 = vrot.lane.b32.xlu0 %v720, 59
  %v848 = vpop.permute.xlu0 %847
  %849 = vrot.lane.b32.xlu0 %v721, 59
  %v850 = vpop.permute.xlu0 %849
  %851 = vrot.lane.b32.xlu0 %v722, 59
  %v852 = vpop.permute.xlu0 %851
  %853 = vrot.lane.b32.xlu0 %v723, 59
  %v854 = vpop.permute.xlu0 %853
  %v855 = vsel %vm378, %v848, %v850
  %v856 = vsel %vm378, %v850, %v852
  %v857 = vsel %vm378, %v852, %v854
  %v863 = vsel %vm378, %v854, %v848
  %864 = vmatprep.subr.mxu0 %v557
  %865 = vmatpush1.msra.mxu0 %v564
  %866 = vmatprep.subr.mxu0 %v574
  %867 = vmatpush1.msra.mxu0 %v581
  %868 = vmatprep.subr.mxu0 %v591
  %869 = vmatpush1.msra.mxu0 %v598
  %870 = vmatprep.subr.mxu0 %v608
  %871 = vmatpush1.msra.mxu0 %v615
  %872 = vmatprep.subr.mxu0 %v541
  %873 = vmatpush1.msra.mxu0 %v540
  %874 = vmatprep.subr.mxu0 %v625
  %875 = vmatpush1.msra.mxu0 %v624
  %876 = vmatprep.subr.mxu0 %v642
  %877 = vmatpush1.msra.mxu0 %v641
  %878 = vmatprep.subr.mxu0 %v659
  %879 = vmatpush1.msra.mxu0 %v658
  %880 = vmatprep.subr.mxu0 %v676
  %881 = vmatpush1.msra.mxu0 %v675
  %882 = vmatprep.subr.mxu0 %v737
  %883 = vmatpush1.msra.mxu0 %v744
  %884 = vmatprep.subr.mxu0 %v754
  %885 = vmatpush1.msra.mxu0 %v753
  %886 = vmatprep.subr.mxu0 %v771
  %887 = vmatpush1.msra.mxu0 %v778
  %888 = vmatprep.subr.mxu0 %v788
  %889 = vmatpush1.msra.mxu0 %v787
  %890 = vmatprep.subr.mxu0 %v805
  %891 = vmatpush1.msra.mxu0 %v812
  %892 = vmatprep.subr.mxu0 %v822
  %893 = vmatpush1.msra.mxu0 %v829
  %894 = vmatprep.subr.mxu0 %v839
  %895 = vmatpush1.msra.mxu0 %v838
  %896 = vmatprep.subr.mxu0 %v856
  %897 = vmatpush1.msra.mxu0 %v855
  %898 = vmatprep.subr.mxu0 0.0
  %899 = vmatpush1.msra.mxu0 0.0
  %900 = vmatprep.subr.mxu0 0.0
  %901 = vmatpush1.msra.mxu0 0.0
  %902 = vmatprep.subr.mxu0 0.0
  %903 = vmatpush1.msra.mxu0 0.0
  %904 = vmatprep.subr.mxu0 0.0
  %905 = vmatpush1.msra.mxu0 0.0
  %906 = vmatprep.subr.mxu0 0.0
  %907 = vmatpush1.msra.mxu0 0.0
  %908 = vmatprep.subr.mxu0 0.0
  %909 = vmatpush1.msra.mxu0 0.0
  %910 = vmatprep.subr.mxu0 0.0
  %911 = vmatpush1.msra.mxu0 0.0
  %912 = vmatprep.subr.mxu0 0.0
  %913 = vmatpush1.msra.mxu0 0.0
  %914 = vmatprep.subr.mxu0 0.0
  %915 = vmatpush1.msra.mxu0 0.0
  %916 = vmatprep.subr.mxu0 0.0
  %917 = vmatpush1.msra.mxu0 0.0
  %918 = vmatprep.subr.mxu0 0.0
  %919 = vmatpush1.msra.mxu0 0.0
  %920 = vmatprep.subr.mxu0 0.0
  %921 = vmatpush1.msra.mxu0 0.0
  %922 = vmatprep.subr.mxu0 0.0
  %923 = vmatpush1.msra.mxu0 0.0
  %924 = vmatprep.subr.mxu0 0.0
  %925 = vmatpush1.msra.mxu0 0.0
  %926 = vmatprep.subr.mxu0 0.0
  %927 = vmatpush1.msra.mxu0 0.0
  %928 = vmatprep.mubr.f32.mxu0 %v395
  %929 = vmatmul.mubr.f32.gmra.mrb[0].mxu0 %v23
  %v930 = vpop.f32.mrb[0].mxu0
  %v931 = vadd.f32 %v391, %v930
  %v932 = vpop.f32.mrb[0].mxu0
  %v933 = vadd.f32 %v391, %v932
  %934 = vdwg.mxu0
  %935 = vmatprep.subr.mxu0 %v559
  %936 = vmatpush1.msra.mxu0 %v558
  %937 = vmatprep.subr.mxu0 %v576
  %938 = vmatpush1.msra.mxu0 %v575
  %939 = vmatprep.subr.mxu0 %v593
  %940 = vmatpush1.msra.mxu0 %v592
  %941 = vmatprep.subr.mxu0 %v610
  %942 = vmatpush1.msra.mxu0 %v609
  %943 = vmatprep.subr.mxu0 %v543
  %944 = vmatpush1.msra.mxu0 %v542
  %945 = vmatprep.subr.mxu0 %v632
  %946 = vmatpush1.msra.mxu0 %v626
  %947 = vmatprep.subr.mxu0 %v649
  %948 = vmatpush1.msra.mxu0 %v643
  %949 = vmatprep.subr.mxu0 %v666
  %950 = vmatpush1.msra.mxu0 %v660
  %951 = vmatprep.subr.mxu0 %v683
  %952 = vmatpush1.msra.mxu0 %v677
  %953 = vmatprep.subr.mxu0 %v739
  %954 = vmatpush1.msra.mxu0 %v738
  %955 = vmatprep.subr.mxu0 %v761
  %956 = vmatpush1.msra.mxu0 %v755
  %957 = vmatprep.subr.mxu0 %v773
  %958 = vmatpush1.msra.mxu0 %v772
  %959 = vmatprep.subr.mxu0 %v795
  %960 = vmatpush1.msra.mxu0 %v789
  %961 = vmatprep.subr.mxu0 %v807
  %962 = vmatpush1.msra.mxu0 %v806
  %963 = vmatprep.subr.mxu0 %v824
  %964 = vmatpush1.msra.mxu0 %v823
  %965 = vmatprep.subr.mxu0 %v846
  %966 = vmatpush1.msra.mxu0 %v840
  %967 = vmatprep.subr.mxu0 %v863
  %968 = vmatpush1.msra.mxu0 %v857
  %969 = vmatprep.subr.mxu0 0.0
  %970 = vmatpush1.msra.mxu0 0.0
  %971 = vmatprep.subr.mxu0 0.0
  %972 = vmatpush1.msra.mxu0 0.0
  %973 = vmatprep.subr.mxu0 0.0
  %974 = vmatpush1.msra.mxu0 0.0
  %975 = vmatprep.subr.mxu0 0.0
  %976 = vmatpush1.msra.mxu0 0.0
  %977 = vmatprep.subr.mxu0 0.0
  %978 = vmatpush1.msra.mxu0 0.0
  %979 = vmatprep.subr.mxu0 0.0
  %980 = vmatpush1.msra.mxu0 0.0
  %981 = vmatprep.subr.mxu0 0.0
  %982 = vmatpush1.msra.mxu0 0.0
  %983 = vmatprep.subr.mxu0 0.0
  %984 = vmatpush1.msra.mxu0 0.0
  %985 = vmatprep.subr.mxu0 0.0
  %986 = vmatpush1.msra.mxu0 0.0
  %987 = vmatprep.subr.mxu0 0.0
  %988 = vmatpush1.msra.mxu0 0.0
  %989 = vmatprep.subr.mxu0 0.0
  %990 = vmatpush1.msra.mxu0 0.0
  %991 = vmatprep.subr.mxu0 0.0
  %992 = vmatpush1.msra.mxu0 0.0
  %993 = vmatprep.subr.mxu0 0.0
  %994 = vmatpush1.msra.mxu0 0.0
  %995 = vmatprep.subr.mxu0 0.0
  %996 = vmatpush1.msra.mxu0 0.0
  %997 = vmatprep.subr.mxu0 0.0
  %998 = vmatpush1.msra.mxu0 0.0
  %999 = vmatprep.mubr.f32.mxu0 %v395
  %1000 = vmatmul.mubr.f32.gmra.mrb[0].mxu0 %v23
  %v1001 = vpop.f32.mrb[0].mxu0
  %v1002 = vadd.f32 %v391, %v1001
  %v1003 = vpop.f32.mrb[0].mxu0
  %v1004 = vadd.f32 %v391, %v1003
  %1005 = vdwg.mxu0
  %v1006 = vmul.f32 %v464, %v219
  %v1007 = vmul.f32 %v466, %v223
  %v1008 = vmul.f32 %v535, %v227
  %v1009 = vmul.f32 %v537, %v231
  %v1010 = vmul.f32 %v931, %v219
  %v1011 = vmul.f32 %v933, %v223
  %v1012 = vmul.f32 %v1002, %v227
  %v1013 = vmul.f32 %v1004, %v231
  %v1014 = vadd.f32 %v1006, %v1010
  %v1015 = vadd.f32 %v1007, %v1011
  %v1016 = vadd.f32 %v1008, %v1012
  %v1017 = vadd.f32 %v1009, %v1013
  %v1018 = vadd.f32 %v1014, %v1015
  %v1019 = vadd.f32 %v1018, %v1016
  %v1020 = vadd.f32 %v1019, %v1017
  %1021 = vadd.xlane.f32.xlu0 %v1020
  %v1022 = vpop.xlane.xlu0 %1021
  %v1023 = vmul.f32 %v1022, 0.001953125
  %v1024 = vsub.f32 %v464, %v1023
  %v1025 = vsub.f32 %v466, %v1023
  %v1026 = vsub.f32 %v535, %v1023
  %v1027 = vsub.f32 %v537, %v1023
  %v1028 = vmul.f32 %v1024, %v219
  %v1029 = vmul.f32 %v1025, %v223
  %v1030 = vmul.f32 %v1026, %v227
  %v1031 = vmul.f32 %v1027, %v231
  %v1032 = vmul.f32 %v1028, %v1028
  %v1033 = vmul.f32 %v1029, %v1029
  %v1034 = vmul.f32 %v1030, %v1030
  %v1035 = vmul.f32 %v1031, %v1031
  %v1036 = vadd.f32 %v1032, %v1033
  %v1037 = vadd.f32 %v1036, %v1034
  %v1038 = vadd.f32 %v1037, %v1035
  %1039 = vadd.xlane.f32.xlu0 %v1038
  %v1040 = vpop.xlane.xlu0 %1039
  %v1041 = vsub.f32 %v931, %v1023
  %v1042 = vsub.f32 %v933, %v1023
  %v1043 = vsub.f32 %v1002, %v1023
  %v1044 = vsub.f32 %v1004, %v1023
  %v1045 = vmul.f32 %v1041, %v219
  %v1046 = vmul.f32 %v1042, %v223
  %v1047 = vmul.f32 %v1043, %v227
  %v1048 = vmul.f32 %v1044, %v231
  %v1049 = vmul.f32 %v1045, %v1045
  %v1050 = vmul.f32 %v1046, %v1046
  %v1051 = vmul.f32 %v1047, %v1047
  %v1052 = vmul.f32 %v1048, %v1048
  %v1053 = vadd.f32 %v1049, %v1050
  %v1054 = vadd.f32 %v1053, %v1051
  %v1055 = vadd.f32 %v1054, %v1052
  %1056 = vadd.xlane.f32.xlu0 %v1055
  %v1057 = vpop.xlane.xlu0 %1056
  %v1058 = vadd.f32 %v1040, %v1057
  %v1059 = vmul.f32 %v1058, 0.001953125
  %v1060 = vld [vmem:[%s4] sm:$0xff]
  %v1061 = vadd.f32 %v1059, 1e-05
  %v1062 = vrsqrt.pop %v1061
  %v1063 = vmul.f32 %v1060, %v1062
  %v1064 = vld [vmem:[%s5] sm:$0xff]
  %v1065 = vmul.f32 %v1023, %v1063
  %v1066 = vsub.f32 %v1064, %v1065
  %1068 = vset.pattern.permute.xlu0 0
  %1069 = vperm.xlu0 %1068, %v1063
  %v1070 = vpop.permute.xlu0 %1069
  %v1072 = vmul.f32 %v464, %v1070
  %v1073 = vmul.f32 %v466, %v1070
  %v1074 = vmul.f32 %v535, %v1070
  %v1075 = vmul.f32 %v537, %v1070
  %1077 = vset.pattern.permute.xlu0 0
  %1078 = vperm.xlu0 %1077, %v1066
  %v1079 = vpop.permute.xlu0 %1078
  %v1081 = vadd.f32 %v1072, %v1079
  %v1082 = vadd.f32 %v1073, %v1079
  %v1083 = vadd.f32 %v1074, %v1079
  %v1084 = vadd.f32 %v1075, %v1079
  %v1085 = vmax.f32 %v1081, 0.0
  %v1086 = vmax.f32 %v1082, 0.0
  %v1087 = vmax.f32 %v1083, 0.0
  %v1088 = vmax.f32 %v1084, 0.0
  %1089 = vst [vmem:[%s6] sm:$0xff] %v1085
  %1090 = vst [vmem:[%s6 + $0x8] sm:$0xff] %v1086
  %1091 = vst [vmem:[%s6 + $0x10] sm:$0xff] %v1087
  %1092 = vst [vmem:[%s6 + $0x18] sm:$0xff] %v1088
  %v1093 = vmul.f32 %v931, %v1070
  %v1094 = vmul.f32 %v933, %v1070
  %v1095 = vmul.f32 %v1002, %v1070
  %v1096 = vmul.f32 %v1004, %v1070
  %v1097 = vadd.f32 %v1093, %v1079
  %v1098 = vadd.f32 %v1094, %v1079
  %v1099 = vadd.f32 %v1095, %v1079
  %v1100 = vadd.f32 %v1096, %v1079
  %v1101 = vmax.f32 %v1097, 0.0
  %v1102 = vmax.f32 %v1098, 0.0
  %v1103 = vmax.f32 %v1099, 0.0
  %v1104 = vmax.f32 %v1100, 0.0
  %s1105 = scalar_lea.vmem %s6, 32
  %1106 = vst [vmem:[%s1105] sm:$0xff] %v1101
  %1107 = vst [vmem:[%s1105 + $0x8] sm:$0xff] %v1102
  %1108 = vst [vmem:[%s1105 + $0x10] sm:$0xff] %v1103
  %1109 = vst [vmem:[%s1105 + $0x18] sm:$0xff] %v1104
  // Predicated region
  $region26: #{large_field_9_forward.1} parent=0 // pred_check
    _
  $region27: #{large_field_9_forward.1} parent=0 // pred_check_branch
    %1111 = sbr.rel (0) target = $region29
  $region28: #{large_field_9_forward.1} parent=0 // pred_region
    _
  $region29: #{large_field_9_forward.1} parent=0 // pred_fallthru
    _
  // Predicated region
  $region30: #{large_field_9_forward.1} parent=0 // pred_check
    _
  $region31: #{large_field_9_forward.1} parent=0 // pred_check_branch
    %1113 = sbr.rel (0) target = $region33
  $region32: #{large_field_9_forward.1} parent=0 // pred_region
    _
  $region33: #{large_field_9_forward.1} parent=0 // pred_fallthru
    _

</llo_original>
